<compile_context>
chip_gen: v7x
topology: tpu7x:2x2x1
jax: 0.10.0
libtpu: 0.0.40
codegen_flags: <defaults>
</compile_context>

<pallas_src>
import functools

import jax
import jax.numpy as jnp
from jax.experimental import pallas as pl
from jax.experimental.pallas import tpu as pltpu


def _normalize_kernel(img_ref, scale_ref, bias_ref, out_ref):
    # img_ref/out_ref: (RB, LB) dense tile; scale_ref/bias_ref: (RB, 1) f32,
    # broadcast over the lane dim.
    x = img_ref[...].astype(jnp.float32)
    out_ref[...] = (x * scale_ref[...] + bias_ref[...]).astype(out_ref.dtype)


def _choose_tiles(rows, cols, itemsize):
    """Pick a dense (RB, LB) block: LB multiple of 128 (or full), RB multiple of 8 (or full)."""
    lane_cap = 16384                      # elements (multiple of 128)
    if cols % 128 == 0:
        lb = min(cols, lane_cap)
    else:
        # Not a multiple of 128: use the full extent (allowed by Mosaic).
        # Typical image H*W (256, 50176, ...) is already a multiple of 128.
        lb = cols
    target_block_bytes = 1 << 20          # ~1 MiB per block
    rb = max(1, target_block_bytes // max(1, lb * itemsize))
    rb = min(rb, rows)
    if rows >= 8:
        rb = max(8, (rb // 8) * 8)        # sublane-dense (multiple of 8)
    # else rb == rows == full dim, which is also allowed.
    return rb, lb


def normalization(img, mean, std):
    """(img - mean[:,None,None]) / std[:,None,None] as a lane-dense Pallas kernel."""
    N, C, H, W = img.shape
    out_dtype = img.dtype
    itemsize = jnp.dtype(out_dtype).itemsize

    mean32 = jnp.asarray(mean, jnp.float32).reshape(-1)
    std32 = jnp.asarray(std, jnp.float32).reshape(-1)
    assert mean32.shape == (C,) and std32.shape == (C,)

    # Precompute affine params in f32 (FMA in-kernel instead of subtract+divide).
    scale = 1.0 / std32                    # (C,)
    bias = -mean32 / std32                 # (C,)

    rows, cols = N * C, H * W
    img2 = img.reshape(rows, cols)         # free reshape for contiguous NCHW

    # Per-row (n,c) params so a block can span multiple channels.
    scale_rows = jnp.tile(scale, N).reshape(rows, 1)
    bias_rows = jnp.tile(bias, N).reshape(rows, 1)

    rb, lb = _choose_tiles(rows, cols, itemsize)
    grid = (pl.cdiv(rows, rb), pl.cdiv(cols, lb))

    grid_spec = pl.GridSpec(
        grid=grid,
        in_specs=[
            pl.BlockSpec((rb, lb), lambda i, j: (i, j)),   # img tile
            pl.BlockSpec((rb, 1), lambda i, j: (i, 0)),    # per-row scale (f32)
            pl.BlockSpec((rb, 1), lambda i, j: (i, 0)),    # per-row bias  (f32)
        ],
        out_specs=pl.BlockSpec((rb, lb), lambda i, j: (i, j)),
    )

    nelem = rows * cols
    cost = pl.CostEstimate(
        flops=2 * nelem,                   # one mul + one add per element
        transcendentals=0,
        bytes_accessed=2 * nelem * itemsize + 2 * rows * 4,
    )

    out2 = pl.pallas_call(
        _normalize_kernel,
        out_shape=jax.ShapeDtypeStruct((rows, cols), out_dtype),
        grid_spec=grid_spec,
        compiler_params=pltpu.CompilerParams(
            dimension_semantics=("parallel", "parallel"),
            vmem_limit_bytes=32 * 1024 * 1024,
        ),
        cost_estimate=cost,
    )(img2, scale_rows, bias_rows)

    return out2.reshape(N, C, H, W)


if __name__ == "__main__":
    key = jax.random.PRNGKey(0)
    N, C, H, W = 2, 4, 16, 16

    # Deterministic "parameters" analogous to the module's mean/std buffers.
    mean = jnp.array([0.485, 0.456, 0.406, 0.5], dtype=jnp.float32)
    std = jnp.array([0.229, 0.224, 0.225, 0.25], dtype=jnp.float32)

    img = jax.random.uniform(key, (N, C, H, W), dtype=jnp.float32)

    out = jax.block_until_ready(normalization(img, mean, std))

    # Reference check (same semantics as the PyTorch module).
    ref = (img - mean[None, :, None, None]) / std[None, :, None, None]
    assert jnp.allclose(out, ref, atol=1e-5, rtol=1e-5), "mismatch vs reference"

    print("KERNEL_OK")
</pallas_src>

<mosaic_0001>
module attributes {stable_mosaic.version = 11 : i64} {
  func.func @_normalize_kernel(%arg0: i32, %arg1: i32, %arg2: memref<8x256xf32, #tpu.memory_space<vmem>>, %arg3: memref<8x1xf32, #tpu.memory_space<vmem>>, %arg4: memref<8x1xf32, #tpu.memory_space<vmem>>, %arg5: memref<8x256xf32, #tpu.memory_space<vmem>>) attributes {dimension_semantics = [#tpu.dimension_semantics<parallel>, #tpu.dimension_semantics<parallel>], iteration_bounds = array<i64: 1, 1>, scalar_prefetch = 0 : i64, scratch_operands = 0 : i64, tpu.core_type = #tpu.core_type<tc>, window_params = [{transform_indices = @transform_0, window_bounds = array<i64: 8, 256>}, {transform_indices = @transform_1, window_bounds = array<i64: 8, 1>}, {transform_indices = @transform_2, window_bounds = array<i64: 8, 1>}, {transform_indices = @transform_3, window_bounds = array<i64: 8, 256>}]} {
    %c0 = arith.constant 0 : index
    %c0_0 = arith.constant 0 : index
    %0 = vector.load %arg2[%c0, %c0_0] : memref<8x256xf32, #tpu.memory_space<vmem>>, vector<8x256xf32>
    %c0_1 = arith.constant 0 : index
    %c0_2 = arith.constant 0 : index
    %1 = vector.load %arg3[%c0_1, %c0_2] : memref<8x1xf32, #tpu.memory_space<vmem>>, vector<8x1xf32>
    %2 = vector.broadcast %1 : vector<8x1xf32> to vector<8x256xf32>
    %3 = arith.mulf %0, %2 : vector<8x256xf32>
    %c0_3 = arith.constant 0 : index
    %c0_4 = arith.constant 0 : index
    %4 = vector.load %arg4[%c0_3, %c0_4] : memref<8x1xf32, #tpu.memory_space<vmem>>, vector<8x1xf32>
    %5 = vector.broadcast %4 : vector<8x1xf32> to vector<8x256xf32>
    %6 = arith.addf %3, %5 : vector<8x256xf32>
    %c0_5 = arith.constant 0 : index
    %c0_6 = arith.constant 0 : index
    %7 = vector.load %arg5[%c0_5, %c0_6] : memref<8x256xf32, #tpu.memory_space<vmem>>, vector<8x256xf32>
    tpu.vector_store %arg5[%c0_5, %c0_6], %6 {strides = array<i32>} : memref<8x256xf32, #tpu.memory_space<vmem>>, vector<8x256xf32>,
    return
  }
  func.func @transform_0(%arg0: i32, %arg1: i32) -> (i32, i32) {
    %c0_i32 = arith.constant 0 : i32
    return %arg0, %arg1 : i32, i32
  }
  func.func @transform_1(%arg0: i32, %arg1: i32) -> (i32, i32) {
    %c0_i32 = arith.constant 0 : i32
    %c0_i32_0 = arith.constant 0 : i32
    return %arg0, %c0_i32 : i32, i32
  }
  func.func @transform_2(%arg0: i32, %arg1: i32) -> (i32, i32) {
    %c0_i32 = arith.constant 0 : i32
    %c0_i32_0 = arith.constant 0 : i32
    return %arg0, %c0_i32 : i32, i32
  }
  func.func @transform_3(%arg0: i32, %arg1: i32) -> (i32, i32) {
    %c0_i32 = arith.constant 0 : i32
    return %arg0, %arg1 : i32, i32
  }
}

</mosaic_0001>

<llo_original>
// kernel: tpu_custom_call.1
$region0: #{tpu_custom_call.1}
  #allocation0 [shape = 'u32[]', space=smem, size = 0x4, offset = 0x4, fixed_abs, tag = 'smem constant byte address 0x4 - core index']
  #allocation1 [shape = 'u32[144,128]{1,0:T(1,128)}', space=vmem, size = 0x12000, scoped, tag = 'internal scratch']
  %s0 = inlined_call_operand.vmem [shape: f32[8,256], index: 0, kind: input, shape index: {}]
  %s1 = inlined_call_operand.vmem [shape: f32[8,1], index: 1, kind: input, shape index: {}]
  %s2 = inlined_call_operand.vmem [shape: f32[8,1], index: 2, kind: input, shape index: {}]
  %s3 = inlined_call_operand.hbm [shape: f32[8,256], index: 3, kind: output, shape index: {}]
  %s4 = sld [smem:[#allocation0]]
  $region22: #{tpu_custom_call.1} parent=0
    _
  %s6 = ssub.s32 1, %s4
  %s7 = scalar_select 0, %s6, %s4
  $region1: #{tpu_custom_call.1} parent=0
    #allocation2 [shape = 'u8[8192]{0}', space=vmem, size = 0x2000, scoped, tag = 'output window, operand 0, single buffered']
    #allocation3 [shape = 's32[1]{0}', space=sflag, size = 0x4, scoped, tag = 'scoped memory for tpu_custom_call.1']
    %8 = vsyncpa [#allocation3], 0
    // Predicated region
    $region2: #{tpu_custom_call.1} parent=1 // pred_check
      _
    $region3: #{tpu_custom_call.1} parent=1 // pred_check_branch
      %10 = sbr.rel (0) target = $region5
    $region4: #{tpu_custom_call.1} parent=1 // pred_region
      _
    $region5: #{tpu_custom_call.1} parent=1 // pred_fallthru
      _
    // Predicated region
    $region6: #{tpu_custom_call.1} parent=1 // pred_check
      _
    $region7: #{tpu_custom_call.1} parent=1 // pred_check_branch
      %12 = sbr.rel (0) target = $region9
    $region8: #{tpu_custom_call.1} parent=1 // pred_region
      _
    $region9: #{tpu_custom_call.1} parent=1 // pred_fallthru
      _
    // Predicated region
    $region10: #{tpu_custom_call.1} parent=1 // pred_check
      _
    $region11: #{tpu_custom_call.1} parent=1 // pred_check_branch
      %14 = sbr.rel (0) target = $region13
    $region12: #{tpu_custom_call.1} parent=1 // pred_region
      _
    $region13: #{tpu_custom_call.1} parent=1 // pred_fallthru
      _
    %v15 = vld [vmem:[%s0] sm:$0xff]
    %v16 = vld [vmem:[%s0 + $0x8] sm:$0xff]
    %v17 = vld [vmem:[%s1] sm:$0xff]
    %19 = vset.pattern.permute.xlu0 0
    %20 = vperm.xlu0 %19, %v17
    %v21 = vpop.permute.xlu0 %20
    %v23 = vmul.f32 %v15, %v21
    %v24 = vmul.f32 %v16, %v21
    %v25 = vld [vmem:[%s2] sm:$0xff]
    %27 = vset.pattern.permute.xlu0 0
    %28 = vperm.xlu0 %27, %v25
    %v29 = vpop.permute.xlu0 %28
    %v31 = vadd.f32 %v23, %v29
    %v32 = vadd.f32 %v24, %v29
    %33 = vst [vmem:[#allocation2] sm:$0xff] %v31
    %34 = vst [vmem:[#allocation2 + $0x8] sm:$0xff] %v32
    // Predicated region
    $region14: #{tpu_custom_call.1} parent=1 // pred_check
      _
    $region15: #{tpu_custom_call.1} parent=1 // pred_check_branch
      %36 = sbr.rel (0) target = $region17
    $region16: #{tpu_custom_call.1} parent=1 // pred_region
      %s38 = ssub.s32 256, 256
      %39 = vsyncadd [#allocation3], %s38
      %s41 = sshll.u32 [#allocation2], 4
      %s42 = int_to_ptr.vmem [resolvable:$true] %s41
      %44 = dma.vmem_to_hbm [thread:$0]  %s42, 256, %s3, [#allocation3]
    $region17: #{tpu_custom_call.1} parent=1 // pred_fallthru
      _
    // Predicated region
    $region18: #{tpu_custom_call.1} parent=1 // pred_check
      _
    $region19: #{tpu_custom_call.1} parent=1 // pred_check_branch
      %46 = sbr.rel (0) target = $region21
    $region20: #{tpu_custom_call.1} parent=1 // pred_region
      %47 = dma.done [#allocation3], 256
    $region21: #{tpu_custom_call.1} parent=1 // pred_fallthru
      _
    %48 = vsyncpa [#allocation3], 1

</llo_original>
